<compile_context>
chip_gen: v7x
topology: tpu7x:2x2x1
jax: 0.10.0
libtpu: 0.0.40
codegen_flags: <defaults>
</compile_context>

<pallas_src>
import functools

import jax
import jax.numpy as jnp
from jax.experimental import pallas as pl
from jax.experimental.pallas import tpu as pltpu


def _round_up(x, m):
    return ((x + m - 1) // m) * m


def _vmem_limit_bytes(est):
    # Explicit scoped-VMEM request: 2x headroom over the estimated working set,
    # floor 32 MiB (v5e scoped default is only 16 MiB), ceiling 60 MiB so it
    # still fits under v7x's 64 MiB physical VMEM.
    return int(min(max(2 * est, 32 << 20), 60 << 20))


# --------------------------------------------------------------------------- #
# Kernel 1: token table  P = emb @ W_i^T + (b_i + b_h)                         #
# --------------------------------------------------------------------------- #
def _proj_kernel(e_ref, w_ref, b_ref, o_ref):
    o_ref[...] = (
        jnp.dot(e_ref[...], w_ref[...], preferred_element_type=jnp.float32)
        + b_ref[...]
    )


# --------------------------------------------------------------------------- #
# Kernel 2a: fused recurrence (small vocab).  P resident in VMEM; per step     #
# the row gather is a one-hot MXU matmul, so no HBM pre-activation stream.     #
# --------------------------------------------------------------------------- #
def _fused_recurrence_kernel(x_ref, p_ref, wh_ref, h0_ref, H_ref, h_scratch, *, ts):
    # grid = (batch_blocks, seq_chunks); time is innermost & sequential.
    @pl.when(pl.program_id(1) == 0)
    def _():
        h_scratch[...] = h0_ref[...]

    tb = h0_ref.shape[0]
    vp = p_ref.shape[0]
    pdt = p_ref.dtype
    wdt = wh_ref.dtype

    def step(i, h):
        ids = x_ref[i]                                            # (TB, 1) int32
        onehot = (ids == jax.lax.broadcasted_iota(jnp.int32, (tb, vp), 1)).astype(pdt)
        # pre_t = P[X[t]]  via one-hot matmul (MXU is otherwise idle here).
        pre_t = jnp.dot(onehot, p_ref[...], preferred_element_type=jnp.float32)
        hh = jnp.dot(h.astype(wdt), wh_ref[...], preferred_element_type=jnp.float32)
        h_new = jnp.tanh(pre_t + hh)                              # f32 elementwise
        H_ref[i] = h_new.astype(H_ref.dtype)
        return h_new

    # Hidden state carried in registers across the unrolled chunk; one VMEM
    # read at chunk start, one write at chunk end.
    h_final = jax.lax.fori_loop(0, ts, step, h_scratch[...], unroll=True)
    h_scratch[...] = h_final


# --------------------------------------------------------------------------- #
# Kernel 2b: recurrence on pre-gathered activations (large-vocab fallback).    #
# --------------------------------------------------------------------------- #
def _recurrence_kernel(pre_ref, wh_ref, h0_ref, H_ref, h_scratch, *, ts):
    @pl.when(pl.program_id(1) == 0)
    def _():
        h_scratch[...] = h0_ref[...]

    wdt = wh_ref.dtype

    def step(i, h):
        hh = jnp.dot(h.astype(wdt), wh_ref[...], preferred_element_type=jnp.float32)
        h_new = jnp.tanh(pre_ref[i].astype(jnp.float32) + hh)
        H_ref[i] = h_new.astype(H_ref.dtype)
        return h_new

    h_final = jax.lax.fori_loop(0, ts, step, h_scratch[...], unroll=True)
    h_scratch[...] = h_final


# --------------------------------------------------------------------------- #
# Wrapper                                                                      #
# --------------------------------------------------------------------------- #
def rnn_forward(X, h0, params, *, seq_chunk=16, num_batch_blocks=1,
                use_bf16=False, fuse_vocab_limit=2048):
    """X: (S, B) int token ids; h0: (B, Dlat) f32 -> H: (S, B, Dlat) f32."""
    emb = params["embedding"].astype(jnp.float32)      # (V, Din)
    wi = params["w_i_weight"].astype(jnp.float32)      # (Dlat, Din)
    bi = params["w_i_bias"].astype(jnp.float32)        # (Dlat,)
    wh = params["w_h_weight"].astype(jnp.float32)      # (Dlat, Dlat)
    bh = params["w_h_bias"].astype(jnp.float32)        # (Dlat,)

    S, B = X.shape
    V, Din = emb.shape
    Dlat = h0.shape[1]

    # ---- tiling ------------------------------------------------------------
    TS = max(1, min(S, seq_chunk))                     # timesteps per grid step
    S_p = _round_up(S, TS)
    NT = S_p // TS

    # Batch-block split only helps on multi-TC chips (v7x); default is 1.
    NB = int(num_batch_blocks)
    if NB < 1 or B < 8 * NB:
        NB = 1
    B_p = _round_up(B, 8 * NB)
    TB = B_p // NB

    Din_p = _round_up(Din, 128)
    Dlat_p = _round_up(Dlat, 128)
    V_p = _round_up(V, 128)
    TV = V_p if V_p <= 1024 else 512                   # vocab rows per proj block
    V_p = _round_up(V_p, TV)

    # ---- pad / prep (jnp.pad; in production prepare these once per model) ---
    emb_p = jnp.pad(emb, ((0, V_p - V), (0, Din_p - Din)))
    wi_t = jnp.pad(wi.T, ((0, Din_p - Din), (0, Dlat_p - Dlat)))
    wh_t = jnp.pad(wh.T, ((0, Dlat_p - Dlat), (0, Dlat_p - Dlat)))
    bias = jnp.pad((bi + bh)[None, :], ((0, 0), (0, Dlat_p - Dlat)))
    h0_p = jnp.pad(h0.astype(jnp.float32), ((0, B_p - B), (0, Dlat_p - Dlat)))
    X_p = jnp.pad(X.astype(jnp.int32), ((0, S_p - S), (0, B_p - B)))

    # ---- kernel 1: token table P = emb @ W_i^T + (b_i + b_h) ----------------
    est1 = 4 * (2 * TV * Din_p + 2 * Din_p * Dlat_p + 2 * Dlat_p + 2 * TV * Dlat_p)
    P = pl.pallas_call(
        _proj_kernel,
        out_shape=jax.ShapeDtypeStruct((V_p, Dlat_p), jnp.float32),
        grid_spec=pltpu.PrefetchScalarGridSpec(
            num_scalar_prefetch=0,
            grid=(V_p // TV,),
            in_specs=[
                pl.BlockSpec((TV, Din_p), lambda i: (i, 0)),       # emb rows
                pl.BlockSpec((Din_p, Dlat_p), lambda i: (0, 0)),   # W_i^T (resident)
                pl.BlockSpec((1, Dlat_p), lambda i: (0, 0)),       # b_i + b_h
            ],
            out_specs=pl.BlockSpec((TV, Dlat_p), lambda i: (i, 0)),
        ),
        compiler_params=pltpu.CompilerParams(
            dimension_semantics=("parallel",),
            vmem_limit_bytes=_vmem_limit_bytes(est1),
        ),
    )(emb_p, wi_t, bias)

    mm_dtype = jnp.bfloat16 if use_bf16 else jnp.float32
    msz = jnp.dtype(mm_dtype).itemsize
    wh_mm = wh_t.astype(mm_dtype)

    # Fuse the table gather into the recurrence when the whole table fits VMEM
    # comfortably (small vocab): zero HBM pre-activation traffic.
    fuse = (V_p <= fuse_vocab_limit) and (V_p * Dlat_p * msz <= (4 << 20))

    if fuse:
        P_mm = P.astype(mm_dtype)
        # NOTE: the token-id block has a trailing lane dim of 1 (padded layout);
        # negligible at these sizes, and keeps the BlockSpec valid for NB > 1.
        est2 = (2 * TS * TB * 128 * 4          # token-id blocks (lane-padded)
                + 2 * V_p * Dlat_p * msz       # P (resident)
                + 2 * Dlat_p * Dlat_p * msz    # W_h^T (resident)
                + 2 * TB * Dlat_p * 4          # h0 block
                + 2 * TS * TB * Dlat_p * 4     # H output chunk (double buffered)
                + TB * Dlat_p * 4)             # h scratch
        H_p = pl.pallas_call(
            functools.partial(_fused_recurrence_kernel, ts=TS),
            out_shape=jax.ShapeDtypeStruct((S_p, B_p, Dlat_p), jnp.float32),
            grid_spec=pltpu.PrefetchScalarGridSpec(
                num_scalar_prefetch=0,
                grid=(NB, NT),
                in_specs=[
                    pl.BlockSpec((TS, TB, 1), lambda b, t: (t, b, 0)),      # token ids
                    pl.BlockSpec((V_p, Dlat_p), lambda b, t: (0, 0)),       # P table
                    pl.BlockSpec((Dlat_p, Dlat_p), lambda b, t: (0, 0)),    # W_h^T
                    pl.BlockSpec((TB, Dlat_p), lambda b, t: (b, 0)),        # h0 block
                ],
                out_specs=pl.BlockSpec((TS, TB, Dlat_p), lambda b, t: (t, b, 0)),
                scratch_shapes=[pltpu.VMEM((TB, Dlat_p), jnp.float32)],
            ),
            compiler_params=pltpu.CompilerParams(
                dimension_semantics=("parallel", "arbitrary"),
                vmem_limit_bytes=_vmem_limit_bytes(est2),
            ),
        )(X_p.reshape(S_p, B_p, 1), P_mm, wh_mm, h0_p)
    else:
        # Large vocab: gather the pre-activations once in XLA glue (lane-dense
        # (S, B, Dlat) stream, bf16 when enabled to halve HBM traffic).
        pre = P.astype(mm_dtype)[X_p]                    # (S_p, B_p, Dlat_p)
        est2 = (2 * TS * TB * Dlat_p * msz
                + 2 * Dlat_p * Dlat_p * msz
                + 2 * TB * Dlat_p * 4
                + 2 * TS * TB * Dlat_p * 4
                + TB * Dlat_p * 4)
        H_p = pl.pallas_call(
            functools.partial(_recurrence_kernel, ts=TS),
            out_shape=jax.ShapeDtypeStruct((S_p, B_p, Dlat_p), jnp.float32),
            grid_spec=pltpu.PrefetchScalarGridSpec(
                num_scalar_prefetch=0,
                grid=(NB, NT),
                in_specs=[
                    pl.BlockSpec((TS, TB, Dlat_p), lambda b, t: (t, b, 0)),  # pre chunk
                    pl.BlockSpec((Dlat_p, Dlat_p), lambda b, t: (0, 0)),     # W_h^T
                    pl.BlockSpec((TB, Dlat_p), lambda b, t: (b, 0)),         # h0 block
                ],
                out_specs=pl.BlockSpec((TS, TB, Dlat_p), lambda b, t: (t, b, 0)),
                scratch_shapes=[pltpu.VMEM((TB, Dlat_p), jnp.float32)],
            ),
            compiler_params=pltpu.CompilerParams(
                dimension_semantics=("parallel", "arbitrary"),
                vmem_limit_bytes=_vmem_limit_bytes(est2),
            ),
        )(pre, wh_mm, h0_p)

    return H_p[:S, :B, :Dlat]


# --------------------------------------------------------------------------- #
# Pure-JAX reference mirroring the PyTorch forward loop                        #
# --------------------------------------------------------------------------- #
def rnn_forward_ref(X, h0, params):
    emb = params["embedding"]
    wi = params["w_i_weight"]
    bi = params["w_i_bias"]
    wh = params["w_h_weight"]
    bh = params["w_h_bias"]

    def step(h, x_t):
        x_e = emb[x_t]                                   # (B, Din)
        h_new = jnp.tanh(x_e @ wi.T + bi + h @ wh.T + bh)
        return h_new, h_new

    _, H = jax.lax.scan(step, h0, X)
    return H


def init_params(key, vocab_size, dim_input, dim_latent, dim_output):
    ks = jax.random.split(key, 7)
    scale = 0.1
    return {
        "embedding": scale * jax.random.normal(ks[0], (vocab_size, dim_input), jnp.float32),
        "w_i_weight": scale * jax.random.normal(ks[1], (dim_latent, dim_input), jnp.float32),
        "w_i_bias": scale * jax.random.normal(ks[2], (dim_latent,), jnp.float32),
        "w_h_weight": scale * jax.random.normal(ks[3], (dim_latent, dim_latent), jnp.float32),
        "w_h_bias": scale * jax.random.normal(ks[4], (dim_latent,), jnp.float32),
        # TODO(synk): w_d is only used by RNN.decode(), not forward(); not kernelized here.
        "w_d_weight": scale * jax.random.normal(ks[5], (dim_output, dim_latent), jnp.float32),
        "w_d_bias": scale * jax.random.normal(ks[6], (dim_output,), jnp.float32),
    }


if __name__ == "__main__":
    # Small, forward-consistent shapes.
    seq_len, batch = 8, 4
    vocab_size, dim_input, dim_latent, dim_output = 50, 32, 32, 16

    key = jax.random.PRNGKey(0)
    kp, kx, kh = jax.random.split(key, 3)
    params = init_params(kp, vocab_size, dim_input, dim_latent, dim_output)

    X = jax.random.randint(kx, (seq_len, batch), 0, vocab_size, dtype=jnp.int32)
    h0 = 0.1 * jax.random.normal(kh, (batch, dim_latent), jnp.float32)

    H_ref = jax.block_until_ready(rnn_forward_ref(X, h0, params))

    # Fused token-table path (small vocab: no HBM pre-activation stream).
    H_fused = jax.block_until_ready(rnn_forward(X, h0, params))
    assert H_fused.shape == (seq_len, batch, dim_latent)
    assert jnp.allclose(H_fused, H_ref, atol=1e-5, rtol=1e-5)

    # Large-vocab fallback path (pre-gathered activations) — exercised too.
    H_split = jax.block_until_ready(rnn_forward(X, h0, params, fuse_vocab_limit=0))
    assert H_split.shape == (seq_len, batch, dim_latent)
    assert jnp.allclose(H_split, H_ref, atol=1e-5, rtol=1e-5)

    print("KERNEL_OK")
</pallas_src>

<mosaic_0001>
module attributes {stable_mosaic.version = 11 : i64} {
  func.func @_proj_kernel(%arg0: i32, %arg1: memref<128x128xf32, #tpu.memory_space<vmem>>, %arg2: memref<128x128xf32, #tpu.memory_space<vmem>>, %arg3: memref<1x128xf32, #tpu.memory_space<vmem>>, %arg4: memref<128x128xf32, #tpu.memory_space<vmem>>) attributes {dimension_semantics = [#tpu.dimension_semantics<parallel>], iteration_bounds = array<i64: 1>, scalar_prefetch = 0 : i64, scratch_operands = 0 : i64, tpu.core_type = #tpu.core_type<tc>, window_params = [{transform_indices = @transform_0, window_bounds = array<i64: 128, 128>}, {pipeline_mode = #tpu.pipeline_mode<synchronous>, transform_indices = @transform_1, window_bounds = array<i64: 128, 128>}, {pipeline_mode = #tpu.pipeline_mode<synchronous>, transform_indices = @transform_2, window_bounds = array<i64: 1, 128>}, {transform_indices = @transform_3, window_bounds = array<i64: 128, 128>}]} {
    %c0 = arith.constant 0 : index
    %c0_0 = arith.constant 0 : index
    %0 = vector.load %arg1[%c0, %c0_0] : memref<128x128xf32, #tpu.memory_space<vmem>>, vector<128x128xf32>
    %c0_1 = arith.constant 0 : index
    %c0_2 = arith.constant 0 : index
    %1 = vector.load %arg2[%c0_1, %c0_2] : memref<128x128xf32, #tpu.memory_space<vmem>>, vector<128x128xf32>
    %cst = arith.constant dense<0.000000e+00> : vector<128x128xf32>
    %2 = tpu.matmul %0, %1, %cst {dimension_numbers = #tpu.dot_dimension_numbers<[1], [0], [0], [1], [0, 0, 1, 1], [], []>} : vector<128x128xf32>, vector<128x128xf32>, vector<128x128xf32> -> vector<128x128xf32>
    %c0_3 = arith.constant 0 : index
    %c0_4 = arith.constant 0 : index
    %3 = vector.load %arg3[%c0_3, %c0_4] : memref<1x128xf32, #tpu.memory_space<vmem>>, vector<1x128xf32>
    %4 = vector.broadcast %3 : vector<1x128xf32> to vector<128x128xf32>
    %5 = arith.addf %2, %4 : vector<128x128xf32>
    %c0_5 = arith.constant 0 : index
    %c0_6 = arith.constant 0 : index
    %6 = vector.load %arg4[%c0_5, %c0_6] : memref<128x128xf32, #tpu.memory_space<vmem>>, vector<128x128xf32>
    tpu.vector_store %arg4[%c0_5, %c0_6], %5 {strides = array<i32>} : memref<128x128xf32, #tpu.memory_space<vmem>>, vector<128x128xf32>,
    return
  }
  func.func @transform_0(%arg0: i32) -> (i32, i32) {
    %c0_i32 = arith.constant 0 : i32
    %c0_i32_0 = arith.constant 0 : i32
    return %arg0, %c0_i32 : i32, i32
  }
  func.func @transform_1(%arg0: i32) -> (i32, i32) {
    %c0_i32 = arith.constant 0 : i32
    %c0_i32_0 = arith.constant 0 : i32
    %c0_i32_1 = arith.constant 0 : i32
    return %c0_i32, %c0_i32_0 : i32, i32
  }
  func.func @transform_2(%arg0: i32) -> (i32, i32) {
    %c0_i32 = arith.constant 0 : i32
    %c0_i32_0 = arith.constant 0 : i32
    %c0_i32_1 = arith.constant 0 : i32
    return %c0_i32, %c0_i32_0 : i32, i32
  }
  func.func @transform_3(%arg0: i32) -> (i32, i32) {
    %c0_i32 = arith.constant 0 : i32
    %c0_i32_0 = arith.constant 0 : i32
    return %arg0, %c0_i32 : i32, i32
  }
}

</mosaic_0001>

<llo_original>
// kernel: tpu_custom_call.1
$region0: #{tpu_custom_call.1}
  #allocation0 [shape = 'u32[]', space=smem, size = 0x4, offset = 0x4, fixed_abs, tag = 'smem constant byte address 0x4 - core index']
  #allocation1 [shape = 'u32[144,128]{1,0:T(1,128)}', space=vmem, size = 0x12000, scoped, tag = 'internal scratch']
  %s0 = inlined_call_operand.hbm [shape: f32[128,128], index: 0, kind: input, shape index: {}]
  %s1 = inlined_call_operand.hbm [shape: f32[128,128], index: 1, kind: input, shape index: {}]
  %s2 = inlined_call_operand.vmem [shape: f32[1,128], index: 2, kind: input, shape index: {}]
  %s3 = inlined_call_operand.hbm [shape: f32[128,128], index: 3, kind: output, shape index: {}]
  %s4 = sld [smem:[#allocation0]]
  $region30: #{tpu_custom_call.1} parent=0
    _
  %s6 = ssub.s32 1, %s4
  %s7 = scalar_select 0, %s6, %s4
  $region1: #{tpu_custom_call.1} parent=0
    #allocation2 [shape = 'u8[65536]{0}', space=vmem, size = 0x10000, scoped, tag = 'input window, operand 0, single buffered']
    #allocation3 [shape = 's32[1]{0}', space=sflag, size = 0x4, scoped, tag = 'scoped memory for tpu_custom_call.1']
    #allocation4 [shape = 's32[1]{0}', space=sflag, size = 0x4, scoped, tag = 'scoped memory for tpu_custom_call.1']
    #allocation5 [shape = 'u8[65536]{0}', space=vmem, size = 0x10000, scoped, tag = 'input window, operand 1, single buffered']
    #allocation6 [shape = 's32[1]{0}', space=sflag, size = 0x4, scoped, tag = 'scoped memory for tpu_custom_call.1']
    #allocation7 [shape = 'u8[65536]{0}', space=vmem, size = 0x10000, scoped, tag = 'output window, operand 0, single buffered']
    %8 = vsyncpa [#allocation3], 0
    %9 = vsyncpa [#allocation6], 0
    %10 = vsyncpa [#allocation4], 0
    // Predicated region
    $region2: #{tpu_custom_call.1} parent=1 // pred_check
      _
    $region3: #{tpu_custom_call.1} parent=1 // pred_check_branch
      %12 = sbr.rel (0) target = $region5
    $region4: #{tpu_custom_call.1} parent=1 // pred_region
      %s14 = ssub.s32 2048, 2048
      %15 = vsyncadd [#allocation3], %s14
      %s16 = sshll.u32 [#allocation2], 4
      %s17 = int_to_ptr.vmem [resolvable:$true] %s16
      %22 = dma.hbm_to_vmem [thread:$0]  %s0, 2048, %s17, [#allocation3], 128, 128, 8
    $region5: #{tpu_custom_call.1} parent=1 // pred_fallthru
      _
    // Predicated region
    $region6: #{tpu_custom_call.1} parent=1 // pred_check
      _
    $region7: #{tpu_custom_call.1} parent=1 // pred_check_branch
      %24 = sbr.rel (0) target = $region9
    $region8: #{tpu_custom_call.1} parent=1 // pred_region
      %s26 = ssub.s32 2048, 2048
      %27 = vsyncadd [#allocation6], %s26
      %s28 = sshll.u32 [#allocation5], 4
      %s29 = int_to_ptr.vmem [resolvable:$true] %s28
      %34 = dma.hbm_to_vmem [thread:$0]  %s1, 2048, %s29, [#allocation6], 128, 128, 8
    $region9: #{tpu_custom_call.1} parent=1 // pred_fallthru
      _
    // Predicated region
    $region10: #{tpu_custom_call.1} parent=1 // pred_check
      _
    $region11: #{tpu_custom_call.1} parent=1 // pred_check_branch
      %36 = sbr.rel (0) target = $region13
    $region12: #{tpu_custom_call.1} parent=1 // pred_region
      _
    $region13: #{tpu_custom_call.1} parent=1 // pred_fallthru
      _
    // Predicated region
    $region14: #{tpu_custom_call.1} parent=1 // pred_check
      _
    $region15: #{tpu_custom_call.1} parent=1 // pred_check_branch
      %38 = sbr.rel (0) target = $region17
    $region16: #{tpu_custom_call.1} parent=1 // pred_region
      %39 = dma.done [#allocation3], 2048
    $region17: #{tpu_custom_call.1} parent=1 // pred_fallthru
      _
    // Predicated region
    $region18: #{tpu_custom_call.1} parent=1 // pred_check
      _
    $region19: #{tpu_custom_call.1} parent=1 // pred_check_branch
      %41 = sbr.rel (0) target = $region21
    $region20: #{tpu_custom_call.1} parent=1 // pred_region
      %42 = dma.done [#allocation6], 2048
    $region21: #{tpu_custom_call.1} parent=1 // pred_fallthru
      _
    %v43 = vld [vmem:[#allocation2] sm:$0xff]
    %v44 = vld [vmem:[#allocation2 + $0x8] sm:$0xff]
    %v45 = vld [vmem:[#allocation2 + $0x10] sm:$0xff]
    %v46 = vld [vmem:[#allocation2 + $0x18] sm:$0xff]
    %v47 = vld [vmem:[#allocation2 + $0x20] sm:$0xff]
    %v48 = vld [vmem:[#allocation2 + $0x28] sm:$0xff]
    %v49 = vld [vmem:[#allocation2 + $0x30] sm:$0xff]
    %v50 = vld [vmem:[#allocation2 + $0x38] sm:$0xff]
    %v51 = vld [vmem:[#allocation2 + $0x40] sm:$0xff]
    %v52 = vld [vmem:[#allocation2 + $0x48] sm:$0xff]
    %v53 = vld [vmem:[#allocation2 + $0x50] sm:$0xff]
    %v54 = vld [vmem:[#allocation2 + $0x58] sm:$0xff]
    %v55 = vld [vmem:[#allocation2 + $0x60] sm:$0xff]
    %v56 = vld [vmem:[#allocation2 + $0x68] sm:$0xff]
    %v57 = vld [vmem:[#allocation2 + $0x70] sm:$0xff]
    %v58 = vld [vmem:[#allocation2 + $0x78] sm:$0xff]
    %v59 = vld [vmem:[#allocation5] sm:$0xff]
    %v60 = vld [vmem:[#allocation5 + $0x8] sm:$0xff]
    %v61 = vld [vmem:[#allocation5 + $0x10] sm:$0xff]
    %v62 = vld [vmem:[#allocation5 + $0x18] sm:$0xff]
    %v63 = vld [vmem:[#allocation5 + $0x20] sm:$0xff]
    %v64 = vld [vmem:[#allocation5 + $0x28] sm:$0xff]
    %v65 = vld [vmem:[#allocation5 + $0x30] sm:$0xff]
    %v66 = vld [vmem:[#allocation5 + $0x38] sm:$0xff]
    %v67 = vld [vmem:[#allocation5 + $0x40] sm:$0xff]
    %v68 = vld [vmem:[#allocation5 + $0x48] sm:$0xff]
    %v69 = vld [vmem:[#allocation5 + $0x50] sm:$0xff]
    %v70 = vld [vmem:[#allocation5 + $0x58] sm:$0xff]
    %v71 = vld [vmem:[#allocation5 + $0x60] sm:$0xff]
    %v72 = vld [vmem:[#allocation5 + $0x68] sm:$0xff]
    %v73 = vld [vmem:[#allocation5 + $0x70] sm:$0xff]
    %v74 = vld [vmem:[#allocation5 + $0x78] sm:$0xff]
    %v75 = vld [vmem:[%s2] sm:$0x1]
    %v77 = vlaneseq
    %v78 = vshrl.u32 %v77, 7
    %v79 = vsub.s32 0, %v78
    %v80 = vrot.slane %v75, %v79
    %82 = vmatprep.subr.mxu0 0.0
    %83 = vmatpush1.msra.mxu0 %v59
    %84 = vmatprep.subr.mxu0 0.0
    %85 = vmatpush1.msra.mxu0 %v60
    %86 = vmatprep.subr.mxu0 0.0
    %87 = vmatpush1.msra.mxu0 %v61
    %88 = vmatprep.subr.mxu0 0.0
    %89 = vmatpush1.msra.mxu0 %v62
    %90 = vmatprep.subr.mxu0 0.0
    %91 = vmatpush1.msra.mxu0 %v63
    %92 = vmatprep.subr.mxu0 0.0
    %93 = vmatpush1.msra.mxu0 %v64
    %94 = vmatprep.subr.mxu0 0.0
    %95 = vmatpush1.msra.mxu0 %v65
    %96 = vmatprep.subr.mxu0 0.0
    %97 = vmatpush1.msra.mxu0 %v66
    %98 = vmatprep.subr.mxu0 0.0
    %99 = vmatpush1.msra.mxu0 %v67
    %100 = vmatprep.subr.mxu0 0.0
    %101 = vmatpush1.msra.mxu0 %v68
    %102 = vmatprep.subr.mxu0 0.0
    %103 = vmatpush1.msra.mxu0 %v69
    %104 = vmatprep.subr.mxu0 0.0
    %105 = vmatpush1.msra.mxu0 %v70
    %106 = vmatprep.subr.mxu0 0.0
    %107 = vmatpush1.msra.mxu0 %v71
    %108 = vmatprep.subr.mxu0 0.0
    %109 = vmatpush1.msra.mxu0 %v72
    %110 = vmatprep.subr.mxu0 0.0
    %111 = vmatpush1.msra.mxu0 %v73
    %112 = vmatprep.subr.mxu0 0.0
    %113 = vmatpush1.msra.mxu0 %v74
    %114 = vmatprep.subr.mxu0 0.0
    %115 = vmatpush1.msra.mxu0 0.0
    %116 = vmatprep.subr.mxu0 0.0
    %117 = vmatpush1.msra.mxu0 0.0
    %118 = vmatprep.subr.mxu0 0.0
    %119 = vmatpush1.msra.mxu0 0.0
    %120 = vmatprep.subr.mxu0 0.0
    %121 = vmatpush1.msra.mxu0 0.0
    %122 = vmatprep.subr.mxu0 0.0
    %123 = vmatpush1.msra.mxu0 0.0
    %124 = vmatprep.subr.mxu0 0.0
    %125 = vmatpush1.msra.mxu0 0.0
    %126 = vmatprep.subr.mxu0 0.0
    %127 = vmatpush1.msra.mxu0 0.0
    %128 = vmatprep.subr.mxu0 0.0
    %129 = vmatpush1.msra.mxu0 0.0
    %130 = vmatprep.subr.mxu0 0.0
    %131 = vmatpush1.msra.mxu0 0.0
    %132 = vmatprep.subr.mxu0 0.0
    %133 = vmatpush1.msra.mxu0 0.0
    %134 = vmatprep.subr.mxu0 0.0
    %135 = vmatpush1.msra.mxu0 0.0
    %136 = vmatprep.subr.mxu0 0.0
    %137 = vmatpush1.msra.mxu0 0.0
    %138 = vmatprep.subr.mxu0 0.0
    %139 = vmatpush1.msra.mxu0 0.0
    %140 = vmatprep.subr.mxu0 0.0
    %141 = vmatpush1.msra.mxu0 0.0
    %142 = vmatprep.subr.mxu0 0.0
    %143 = vmatpush1.msra.mxu0 0.0
    %144 = vmatprep.subr.mxu0 0.0
    %145 = vmatpush1.msra.mxu0 0.0
    %146 = vmatprep.mubr.f32.mxu0 0.0
    %147 = vmatmul.mubr.f32.gmra.mrb[0].mxu0 %v43
    %v148 = vpop.f32.mrb[0].mxu0
    %v149 = vadd.f32 %v80, %v148
    %v150 = vpop.f32.mrb[0].mxu0
    %151 = vmatprep.mubr.f32.mxu0 0.0
    %152 = vmatmul.mubr.f32.gmra.mrb[0].mxu0 %v44
    %v153 = vpop.f32.mrb[0].mxu0
    %v154 = vadd.f32 %v80, %v153
    %v155 = vpop.f32.mrb[0].mxu0
    %156 = vmatprep.mubr.f32.mxu0 0.0
    %157 = vmatmul.mubr.f32.gmra.mrb[0].mxu0 %v45
    %v158 = vpop.f32.mrb[0].mxu0
    %v159 = vadd.f32 %v80, %v158
    %v160 = vpop.f32.mrb[0].mxu0
    %161 = vmatprep.mubr.f32.mxu0 0.0
    %162 = vmatmul.mubr.f32.gmra.mrb[0].mxu0 %v46
    %v163 = vpop.f32.mrb[0].mxu0
    %v164 = vadd.f32 %v80, %v163
    %v165 = vpop.f32.mrb[0].mxu0
    %166 = vmatprep.mubr.f32.mxu0 0.0
    %167 = vmatmul.mubr.f32.gmra.mrb[0].mxu0 %v47
    %v168 = vpop.f32.mrb[0].mxu0
    %v169 = vadd.f32 %v80, %v168
    %v170 = vpop.f32.mrb[0].mxu0
    %171 = vmatprep.mubr.f32.mxu0 0.0
    %172 = vmatmul.mubr.f32.gmra.mrb[0].mxu0 %v48
    %v173 = vpop.f32.mrb[0].mxu0
    %v174 = vadd.f32 %v80, %v173
    %v175 = vpop.f32.mrb[0].mxu0
    %176 = vmatprep.mubr.f32.mxu0 0.0
    %177 = vmatmul.mubr.f32.gmra.mrb[0].mxu0 %v49
    %v178 = vpop.f32.mrb[0].mxu0
    %v179 = vadd.f32 %v80, %v178
    %v180 = vpop.f32.mrb[0].mxu0
    %181 = vmatprep.mubr.f32.mxu0 0.0
    %182 = vmatmul.mubr.f32.gmra.mrb[0].mxu0 %v50
    %v183 = vpop.f32.mrb[0].mxu0
    %v184 = vadd.f32 %v80, %v183
    %v185 = vpop.f32.mrb[0].mxu0
    %186 = vmatprep.mubr.f32.mxu0 0.0
    %187 = vmatmul.mubr.f32.gmra.mrb[0].mxu0 %v51
    %v188 = vpop.f32.mrb[0].mxu0
    %v189 = vadd.f32 %v80, %v188
    %v190 = vpop.f32.mrb[0].mxu0
    %191 = vmatprep.mubr.f32.mxu0 0.0
    %192 = vmatmul.mubr.f32.gmra.mrb[0].mxu0 %v52
    %v193 = vpop.f32.mrb[0].mxu0
    %v194 = vadd.f32 %v80, %v193
    %v195 = vpop.f32.mrb[0].mxu0
    %196 = vmatprep.mubr.f32.mxu0 0.0
    %197 = vmatmul.mubr.f32.gmra.mrb[0].mxu0 %v53
    %v198 = vpop.f32.mrb[0].mxu0
    %v199 = vadd.f32 %v80, %v198
    %v200 = vpop.f32.mrb[0].mxu0
    %201 = vmatprep.mubr.f32.mxu0 0.0
    %202 = vmatmul.mubr.f32.gmra.mrb[0].mxu0 %v54
    %v203 = vpop.f32.mrb[0].mxu0
    %v204 = vadd.f32 %v80, %v203
    %v205 = vpop.f32.mrb[0].mxu0
    %206 = vmatprep.mubr.f32.mxu0 0.0
    %207 = vmatmul.mubr.f32.gmra.mrb[0].mxu0 %v55
    %v208 = vpop.f32.mrb[0].mxu0
    %v209 = vadd.f32 %v80, %v208
    %v210 = vpop.f32.mrb[0].mxu0
    %211 = vmatprep.mubr.f32.mxu0 0.0
    %212 = vmatmul.mubr.f32.gmra.mrb[0].mxu0 %v56
    %v213 = vpop.f32.mrb[0].mxu0
    %v214 = vadd.f32 %v80, %v213
    %v215 = vpop.f32.mrb[0].mxu0
    %216 = vmatprep.mubr.f32.mxu0 0.0
    %217 = vmatmul.mubr.f32.gmra.mrb[0].mxu0 %v57
    %v218 = vpop.f32.mrb[0].mxu0
    %v219 = vadd.f32 %v80, %v218
    %v220 = vpop.f32.mrb[0].mxu0
    %221 = vmatprep.mubr.f32.mxu0 0.0
    %222 = vmatmul.mubr.f32.gmra.mrb[0].mxu0 %v58
    %v223 = vpop.f32.mrb[0].mxu0
    %v224 = vadd.f32 %v80, %v223
    %v225 = vpop.f32.mrb[0].mxu0
    %226 = vdwg.mxu0
    %227 = vst [vmem:[#allocation7] sm:$0xff] %v149
    %228 = vst [vmem:[#allocation7 + $0x8] sm:$0xff] %v154
    %229 = vst [vmem:[#allocation7 + $0x10] sm:$0xff] %v159
    %230 = vst [vmem:[#allocation7 + $0x18] sm:$0xff] %v164
    %231 = vst [vmem:[#allocation7 + $0x20] sm:$0xff] %v169
    %232 = vst [vmem:[#allocation7 + $0x28] sm:$0xff] %v174
    %233 = vst [vmem:[#allocation7 + $0x30] sm:$0xff] %v179
    %234 = vst [vmem:[#allocation7 + $0x38] sm:$0xff] %v184
    %235 = vst [vmem:[#allocation7 + $0x40] sm:$0xff] %v189
    %236 = vst [vmem:[#allocation7 + $0x48] sm:$0xff] %v194
    %237 = vst [vmem:[#allocation7 + $0x50] sm:$0xff] %v199
    %238 = vst [vmem:[#allocation7 + $0x58] sm:$0xff] %v204
    %239 = vst [vmem:[#allocation7 + $0x60] sm:$0xff] %v209
    %240 = vst [vmem:[#allocation7 + $0x68] sm:$0xff] %v214
    %241 = vst [vmem:[#allocation7 + $0x70] sm:$0xff] %v219
    %242 = vst [vmem:[#allocation7 + $0x78] sm:$0xff] %v224
    // Predicated region
    $region22: #{tpu_custom_call.1} parent=1 // pred_check
      _
    $region23: #{tpu_custom_call.1} parent=1 // pred_check_branch
      %244 = sbr.rel (0) target = $region25
    $region24: #{tpu_custom_call.1} parent=1 // pred_region
      %s246 = ssub.s32 2048, 2048
      %247 = vsyncadd [#allocation4], %s246
      %s248 = sshll.u32 [#allocation7], 4
      %s249 = int_to_ptr.vmem [resolvable:$true] %s248
      %254 = dma.vmem_to_hbm [thread:$0]  %s249, 2048, %s3, [#allocation4], 128, 128, 8
    $region25: #{tpu_custom_call.1} parent=1 // pred_fallthru
      _
    // Predicated region
    $region26: #{tpu_custom_call.1} parent=1 // pred_check
      _
    $region27: #{tpu_custom_call.1} parent=1 // pred_check_branch
      %256 = sbr.rel (0) target = $region29
    $region28: #{tpu_custom_call.1} parent=1 // pred_region
      %257 = dma.done [#allocation4], 2048
    $region29: #{tpu_custom_call.1} parent=1 // pred_fallthru
      _
    %258 = vsyncpa [#allocation3], 1
    %259 = vsyncpa [#allocation6], 1
    %260 = vsyncpa [#allocation4], 1

</llo_original>
